<compile_context>
chip_gen: v7x
topology: tpu7x:2x2x1
jax: 0.10.0
libtpu: 0.0.40
codegen_flags: <defaults>
</compile_context>

<pallas_src>
import jax
import jax.numpy as jnp
from jax import lax
from jax.experimental import pallas as pl
from jax.experimental.pallas import tpu as pltpu

_LANES = 128


def _round_up(x, m):
    return ((x + m - 1) // m) * m


def _cox_risk_sum_kernel(nact_ref, e_j_ref, t_j_ref, t_i_ref, s_ref):
    """One (BI, BJ) tile of the risk-set exp-sum, accumulated across j.

    e_j_ref, t_j_ref : (BJ/128, 128)  shifted exp(log_hz_j) and time_j (lanes)
    t_i_ref          : (BI, 1)        time_i (sublanes, event rows first)
    s_ref            : (BI, 1)        output exp-sum, resident across the j axis
    nact_ref         : (1,) int32     number of i-blocks containing events (SMEM)
    """
    i = pl.program_id(0)
    j = pl.program_id(1)

    @pl.when(j == 0)
    def _init():
        s_ref[...] = jnp.zeros_like(s_ref)

    # Skip all compute for i-blocks that contain no event rows (events were
    # compacted to the front of the i axis in the wrapper).
    @pl.when(i < nact_ref[0])
    def _compute():
        bi = t_i_ref.shape[0]
        n_chunks = e_j_ref.shape[0]          # BJ / 128 (static)

        # Hoisted lane-broadcast (JAX does not CSE broadcast_in_dim).
        t_i_b = jnp.broadcast_to(t_i_ref[...], (bi, _LANES))

        def chunk(c, part):
            e_c = e_j_ref[pl.ds(c, 1), :]     # (1, 128)   shifted exp
            t_c = t_j_ref[pl.ds(c, 1), :]     # (1, 128)
            risk = t_c >= t_i_b               # (BI, 128)  VALU compare
            return part + jnp.where(risk, e_c, 0.0)   # select + add, VALU

        part = lax.fori_loop(0, n_chunks, chunk,
                             jnp.zeros((bi, _LANES), jnp.float32),
                             unroll=min(4, n_chunks))

        # Single cross-lane reduce (XLU — not the binding slot) per grid step.
        s_ref[...] += jnp.sum(part, axis=-1, keepdims=True)


def _cox_risk_sum_pallas(e_j2, t_j2, t_i_col, n_act, bi, bj):
    """Per-(permuted, padded)-sample risk-set exp-sum s_i, shape (n_pad_i, 1)."""
    n_pad_i = t_i_col.shape[0]
    rows_j = e_j2.shape[0]                   # n_pad_j / 128
    bj_rows = bj // _LANES
    n_i = n_pad_i // bi
    n_j = (rows_j * _LANES) // bj

    grid_spec = pltpu.PrefetchScalarGridSpec(
        num_scalar_prefetch=1,               # n_act -> SMEM, trailing index_map arg
        grid=(n_i, n_j),
        in_specs=[
            pl.BlockSpec((bj_rows, _LANES), lambda i, j, nact: (j, 0)),  # exp(log_hz_j)
            pl.BlockSpec((bj_rows, _LANES), lambda i, j, nact: (j, 0)),  # time_j
            pl.BlockSpec((bi, 1), lambda i, j, nact: (i, 0)),            # time_i
        ],
        out_specs=pl.BlockSpec((bi, 1), lambda i, j, nact: (i, 0)),
    )

    return pl.pallas_call(
        _cox_risk_sum_kernel,
        out_shape=jax.ShapeDtypeStruct((n_pad_i, 1), jnp.float32),
        grid_spec=grid_spec,
        compiler_params=pltpu.CompilerParams(
            dimension_semantics=("parallel", "arbitrary"),
            vmem_limit_bytes=32 * 1024 * 1024,
        ),
    )(n_act, e_j2, t_j2, t_i_col)


class NpllLoss:
    """JAX/Pallas equivalent of the PyTorch `npllLoss` module."""

    def __init__(self, reduction="mean", ties_method="breslow",
                 block_i=128, block_j=16384):
        # block_i: i rows per tile (register-resident (BI,128) partial caps this
        #          near 128); block_j: risk-set columns per tile (must be a
        #          multiple of 1024 so the (BJ/128,128) block stays (8,128)-legal).
        assert block_i % 8 == 0
        assert block_j % 1024 == 0
        self.reduction = reduction
        self.ties_method = ties_method   # breslow handled; no-ties cox path identical
        self.block_i = block_i
        self.block_j = block_j

    def __call__(self, input, target, weight):
        log_hz = jnp.asarray(input, jnp.float32).reshape(-1)
        time = jnp.asarray(target, jnp.float32).reshape(-1)
        # module: float weights are truncated to int, then used as the event flag
        # TODO(synk): torchsurv with checks=False would fancy-index with an int
        # tensor; the intended boolean event-mask semantics are implemented.
        event = (jnp.asarray(weight).astype(jnp.int32) != 0).reshape(-1)
        n = log_hz.shape[0]

        # Tile sizes clamp down for small N (keeps the grid minimal); either the
        # clamped bj equals n_pad_j (full-dim block) or it is the 1024-multiple
        # default, so the (8,128) block constraint always holds.
        bi = min(self.block_i, _round_up(max(n, 1), 8))
        bj = min(self.block_j, _round_up(max(n, 1), _LANES))
        n_pad_i = _round_up(n, bi)
        n_pad_j = _round_up(n, bj)

        # --- O(N) pieces stay in XLA -------------------------------------
        # Compact event rows to the front of the i axis so event-free i-blocks
        # are skipped inside the kernel (row order is irrelevant for the sum).
        order = jnp.argsort(jnp.logical_not(event).astype(jnp.int32))
        lhz_i = log_hz[order]
        t_i = time[order]
        ev_i = event[order]

        n_events = jnp.sum(event.astype(jnp.int32))
        n_act = jnp.reshape((n_events + bi - 1) // bi, (1,)).astype(jnp.int32)

        # Shifted exp precomputed once (no per-step EUP work in the kernel).
        gmax = jnp.max(log_hz)
        e_j = jnp.exp(log_hz - gmax)
        # Padded j columns carry e = 0 -> never contribute to any risk set, so
        # no validity mask is needed.  Padded i rows are masked out below.
        e_j_p = jnp.pad(e_j, (0, n_pad_j - n))
        t_j_p = jnp.pad(time, (0, n_pad_j - n))
        t_i_p = jnp.pad(t_i, (0, n_pad_i - n))

        s = _cox_risk_sum_pallas(
            e_j_p.reshape(n_pad_j // _LANES, _LANES),
            t_j_p.reshape(n_pad_j // _LANES, _LANES),
            t_i_p.reshape(n_pad_i, 1),
            n_act, bi, bj)
        s = s.reshape(n_pad_i)[:n]

        # pll_i = log_hz_i - logsumexp over the risk set (events only)
        lse = gmax + jnp.log(s)
        pll = lhz_i - lse
        sum_pll = jnp.sum(jnp.where(ev_i, pll, 0.0))
        n_events_f = n_events.astype(jnp.float32)

        red = self.reduction.lower()
        if red == "mean":
            loss = -sum_pll / n_events_f
        elif red == "sum":
            loss = -sum_pll
        else:
            raise ValueError(f"unsupported reduction {self.reduction!r}")

        # torchsurv returns 0.0 when there are no events
        loss = jnp.where(n_events == 0, jnp.float32(0.0), loss)
        # npllLoss guard: NaN or -inf -> +inf
        loss = jnp.where(jnp.isnan(loss) | jnp.isneginf(loss),
                         jnp.float32(jnp.inf), loss)
        return loss


def _ref_loss(log_hz, time, weight):
    """Pure-JAX reference of the same math (exact logsumexp)."""
    risk = time[None, :] >= time[:, None]
    lse = jax.nn.logsumexp(jnp.where(risk, log_hz[None, :], -jnp.inf), axis=-1)
    pll = log_hz - lse
    ev = jnp.asarray(weight).astype(jnp.int32) != 0
    return -jnp.sum(jnp.where(ev, pll, 0.0)) / jnp.sum(ev)


if __name__ == "__main__":
    key = jax.random.PRNGKey(0)
    k1, k2, k3, k4, k5, k6 = jax.random.split(key, 6)

    # --- small case matching the module's typical usage: seq = 8 samples ---
    N = 8
    log_hz = jax.random.normal(k1, (N,), dtype=jnp.float32)                 # input
    time = jax.random.uniform(k2, (N,), dtype=jnp.float32,
                              minval=0.1, maxval=10.0)                      # target
    weight = (jax.random.uniform(k3, (N,)) > 0.4).astype(jnp.float32)       # event 0/1
    weight = weight.at[0].set(1.0)  # guarantee at least one event

    loss_fn = NpllLoss(reduction="mean", ties_method="breslow")
    loss = jax.jit(loss_fn.__call__)(log_hz, time, weight)
    jax.block_until_ready(loss)
    ref = _ref_loss(log_hz, time, weight)
    assert jnp.allclose(loss, ref, rtol=1e-3, atol=1e-3), (loss, ref)

    # --- medium case with small tiles so the multi-tile paths are exercised:
    #     several j tiles (output-resident accumulation across j), several i
    #     blocks, and event-free i blocks skipped via the prefetched count ---
    M = 1100
    log_hz2 = jax.random.normal(k4, (M,), dtype=jnp.float32)
    time2 = jax.random.uniform(k5, (M,), dtype=jnp.float32,
                               minval=0.1, maxval=10.0)
    weight2 = (jax.random.uniform(k6, (M,)) > 0.5).astype(jnp.float32)
    weight2 = weight2.at[0].set(1.0)

    loss_fn2 = NpllLoss(reduction="mean", block_i=64, block_j=1024)
    loss2 = jax.jit(loss_fn2.__call__)(log_hz2, time2, weight2)
    jax.block_until_ready(loss2)
    ref2 = _ref_loss(log_hz2, time2, weight2)
    assert jnp.allclose(loss2, ref2, rtol=1e-3, atol=1e-3), (loss2, ref2)

    print("KERNEL_OK")
</pallas_src>

<mosaic_0001>
module attributes {stable_mosaic.version = 11 : i64} {
  func.func @_cox_risk_sum_kernel(%arg0: i32, %arg1: i32, %arg2: memref<1xi32, #tpu.memory_space<smem>>, %arg3: memref<1x128xf32, #tpu.memory_space<vmem>>, %arg4: memref<1x128xf32, #tpu.memory_space<vmem>>, %arg5: memref<8x1xf32, #tpu.memory_space<vmem>>, %arg6: memref<8x1xf32, #tpu.memory_space<vmem>>) attributes {dimension_semantics = [#tpu.dimension_semantics<parallel>, #tpu.dimension_semantics<arbitrary>], iteration_bounds = array<i64: 1, 1>, scalar_prefetch = 1 : i64, scratch_operands = 0 : i64, tpu.core_type = #tpu.core_type<tc>, window_params = [{transform_indices = @transform_0, window_bounds = array<i64: 1, 128>}, {transform_indices = @transform_1, window_bounds = array<i64: 1, 128>}, {transform_indices = @transform_2, window_bounds = array<i64: 8, 1>}, {transform_indices = @transform_3, window_bounds = array<i64: 8, 1>}]} {
    %c0_i32 = arith.constant 0 : i32
    %0 = arith.cmpi eq, %arg1, %c0_i32 : i32
    %1 = arith.extui %0 : i1 to i32
    %c0_i32_0 = arith.constant 0 : i32
    %2 = arith.cmpi ne, %1, %c0_i32_0 : i32
    scf.if %2 {
      %cst = arith.constant 0.000000e+00 : f32
      %7 = vector.broadcast %cst : f32 to vector<8x1xf32>
      %c0_2 = arith.constant 0 : index
      %c0_3 = arith.constant 0 : index
      %8 = vector.load %arg6[%c0_2, %c0_3] : memref<8x1xf32, #tpu.memory_space<vmem>>, vector<8x1xf32>
      tpu.vector_store %arg6[%c0_2, %c0_3], %7 {strides = array<i32>} : memref<8x1xf32, #tpu.memory_space<vmem>>, vector<8x1xf32>,
    } else {
    }
    %c0 = arith.constant 0 : index
    %3 = memref.load %arg2[%c0] : memref<1xi32, #tpu.memory_space<smem>>
    %4 = arith.cmpi slt, %arg0, %3 : i32
    %5 = arith.extui %4 : i1 to i32
    %c0_i32_1 = arith.constant 0 : i32
    %6 = arith.cmpi ne, %5, %c0_i32_1 : i32
    scf.if %6 {
      %c0_2 = arith.constant 0 : index
      %c0_3 = arith.constant 0 : index
      %7 = vector.load %arg5[%c0_2, %c0_3] : memref<8x1xf32, #tpu.memory_space<vmem>>, vector<8x1xf32>
      %8 = vector.shape_cast %7 : vector<8x1xf32> to vector<8x1xf32>
      %9 = vector.broadcast %8 : vector<8x1xf32> to vector<8x128xf32>
      %cst = arith.constant 0.000000e+00 : f32
      %10 = vector.broadcast %cst : f32 to vector<8x128xf32>
      %c0_i32_4 = arith.constant 0 : i32
      %11 = arith.index_cast %c0_i32_4 : i32 to index
      %c0_5 = arith.constant 0 : index
      %12 = vector.load %arg3[%11, %c0_5] : memref<1x128xf32, #tpu.memory_space<vmem>>, vector<1x128xf32>
      %13 = arith.index_cast %c0_i32_4 : i32 to index
      %c0_6 = arith.constant 0 : index
      %14 = vector.load %arg4[%13, %c0_6] : memref<1x128xf32, #tpu.memory_space<vmem>>, vector<1x128xf32>
      %15 = vector.broadcast %14 : vector<1x128xf32> to vector<8x128xf32>
      %16 = arith.cmpf oge, %15, %9 : vector<8x128xf32>
      %cst_7 = arith.constant 0.000000e+00 : f32
      %17 = vector.shape_cast %12 : vector<1x128xf32> to vector<1x128xf32>
      %18 = vector.broadcast %17 : vector<1x128xf32> to vector<8x128xf32>
      %19 = vector.broadcast %cst_7 : f32 to vector<8x128xf32>
      %20 = arith.select %16, %18, %19 : vector<8x128xi1>, vector<8x128xf32>
      %21 = arith.addf %10, %20 : vector<8x128xf32>
      %c1_i32 = arith.constant 1 : i32
      %c0_8 = arith.constant 0 : index
      %c0_9 = arith.constant 0 : index
      %22 = vector.load %arg6[%c0_8, %c0_9] : memref<8x1xf32, #tpu.memory_space<vmem>>, vector<8x1xf32>
      %cst_10 = arith.constant dense<0.000000e+00> : vector<8xf32>
      %23 = vector.multi_reduction <add>, %21, %cst_10 [1] : vector<8x128xf32> to vector<8xf32>
      %24 = vector.shape_cast %23 : vector<8xf32> to vector<8x1xf32>
      %25 = arith.addf %22, %24 : vector<8x1xf32>
      %c0_11 = arith.constant 0 : index
      %c0_12 = arith.constant 0 : index
      %26 = vector.load %arg6[%c0_11, %c0_12] : memref<8x1xf32, #tpu.memory_space<vmem>>, vector<8x1xf32>
      tpu.vector_store %arg6[%c0_11, %c0_12], %25 {strides = array<i32>} : memref<8x1xf32, #tpu.memory_space<vmem>>, vector<8x1xf32>,
    } else {
    }
    return
  }
  func.func @transform_0(%arg0: i32, %arg1: i32, %arg2: memref<1xi32, #tpu.memory_space<smem>>) -> (i32, i32) {
    %c0_i32 = arith.constant 0 : i32
    %c0_i32_0 = arith.constant 0 : i32
    return %arg1, %c0_i32 : i32, i32
  }
  func.func @transform_1(%arg0: i32, %arg1: i32, %arg2: memref<1xi32, #tpu.memory_space<smem>>) -> (i32, i32) {
    %c0_i32 = arith.constant 0 : i32
    %c0_i32_0 = arith.constant 0 : i32
    return %arg1, %c0_i32 : i32, i32
  }
  func.func @transform_2(%arg0: i32, %arg1: i32, %arg2: memref<1xi32, #tpu.memory_space<smem>>) -> (i32, i32) {
    %c0_i32 = arith.constant 0 : i32
    %c0_i32_0 = arith.constant 0 : i32
    return %arg0, %c0_i32 : i32, i32
  }
  func.func @transform_3(%arg0: i32, %arg1: i32, %arg2: memref<1xi32, #tpu.memory_space<smem>>) -> (i32, i32) {
    %c0_i32 = arith.constant 0 : i32
    %c0_i32_0 = arith.constant 0 : i32
    return %arg0, %c0_i32 : i32, i32
  }
}

</mosaic_0001>

<llo_original>
// kernel: a_call__.1
$region0: #{a_call__.1}
  #allocation0 [shape = 'u32[]', space=smem, size = 0x4, offset = 0x4, fixed_abs, tag = 'smem constant byte address 0x4 - core index']
  #allocation1 [shape = 'u32[144,128]{1,0:T(1,128)}', space=vmem, size = 0x12000, scoped, tag = 'internal scratch']
  #allocation2 [shape = 's32[1]{0}', space=sflag, size = 0x4, scoped, tag = 'scoped memory for a_call__.1']
  #allocation3 [shape = 's32[1]{0:T(128)S(6)}', space=smem, size = 0x200, scoped, tag = 'prefetched SMEM operand 0']
  %s0 = inlined_call_operand.<no memory space> [shape: s32[1], index: 0, kind: input, shape index: {}]
  %s1 = inlined_call_operand.vmem [shape: f32[1,128], index: 1, kind: input, shape index: {}]
  %s2 = inlined_call_operand.vmem [shape: f32[1,128], index: 2, kind: input, shape index: {}]
  %s3 = inlined_call_operand.vmem [shape: f32[8,1], index: 3, kind: input, shape index: {}]
  %s4 = inlined_call_operand.vmem [shape: f32[8,1], index: 4, kind: output, shape index: {}]
  %s5 = sld [smem:[#allocation0]]
  $region30: #{a_call__.1} parent=0
    _
  %s7 = ssub.s32 1, %s5
  %s8 = scalar_select 0, %s7, %s5
  %9 = sst [smem:[#allocation3]] %s0
  // Predicated region
  $region2: #{a_call__.1} parent=0 // pred_check
    _
  $region3: #{a_call__.1} parent=0 // pred_check_branch
    %11 = sbr.rel (0) target = $region5
  $region4: #{a_call__.1} parent=0 // pred_region
    _
  $region5: #{a_call__.1} parent=0 // pred_fallthru
    _
  // Predicated region
  $region6: #{a_call__.1} parent=0 // pred_check
    _
  $region7: #{a_call__.1} parent=0 // pred_check_branch
    %13 = sbr.rel (0) target = $region9
  $region8: #{a_call__.1} parent=0 // pred_region
    _
  $region9: #{a_call__.1} parent=0 // pred_fallthru
    _
  // Predicated region
  $region10: #{a_call__.1} parent=0 // pred_check
    _
  $region11: #{a_call__.1} parent=0 // pred_check_branch
    %15 = sbr.rel (0) target = $region13
  $region12: #{a_call__.1} parent=0 // pred_region
    _
  $region13: #{a_call__.1} parent=0 // pred_fallthru
    _
  %p16 = scmp.eq.s32.totalorder 0, 0
  // Predicated region
  $region14: #{a_call__.1} parent=0 // pred_check
    %p17 = pneg %p16
  $region15: #{a_call__.1} parent=0 // pred_check_branch
    %19 = sbr.rel (%p17) target = $region17
  $region16: #{a_call__.1} parent=0 // pred_region
    %vm20 = vcmask 7168
    %21 = vst.msk [vmem:[%s4] sm:$0xff] %vm20, 0.0
  $region17: #{a_call__.1} parent=0 // pred_fallthru
    _
  %s22 = sld [smem:[#allocation3]]
  %p23 = scmp.lt.s32.totalorder 0, %s22
  // Predicated region
  $region18: #{a_call__.1} parent=0 // pred_check
    %p24 = pneg %p23
  $region19: #{a_call__.1} parent=0 // pred_check_branch
    %26 = sbr.rel (%p24) target = $region21
  $region20: #{a_call__.1} parent=0 // pred_region
    %v27 = vld [vmem:[%s3] sm:$0xff]
    %29 = vset.pattern.permute.xlu0 0
    %30 = vperm.xlu0 %29, %v27
    %v31 = vpop.permute.xlu0 %30
    %v33 = vld [vmem:[%s1] sm:$0x1]
    %v34 = vld [vmem:[%s2] sm:$0x1]
    %v36 = vlaneseq
    %v37 = vshrl.u32 %v36, 7
    %v38 = vsub.s32 0, %v37
    %v39 = vrot.slane %v34, %v38
    %vm41 = vcmp.ge.f32.partialorder %v39, %v31
    %v43 = vlaneseq
    %v44 = vshrl.u32 %v43, 7
    %v45 = vsub.s32 0, %v44
    %v46 = vrot.slane %v33, %v45
    %v48 = vsel %vm41, %v46, 0.0
    %v49 = vadd.f32 %v48, 0.0
    %v50 = vld [vmem:[%s4] sm:$0xff]
    %51 = vadd.xlane.f32.xlu0 %v49
    %v52 = vpop.xlane.xlu0 %51
    %v53 = vadd.f32 %v50, %v52
    %vm54 = vcmask 7168
    %55 = vst.msk [vmem:[%s4] sm:$0xff] %vm54, %v53
  $region21: #{a_call__.1} parent=0 // pred_fallthru
    _
  // Predicated region
  $region22: #{a_call__.1} parent=0 // pred_check
    _
  $region23: #{a_call__.1} parent=0 // pred_check_branch
    %57 = sbr.rel (0) target = $region25
  $region24: #{a_call__.1} parent=0 // pred_region
    _
  $region25: #{a_call__.1} parent=0 // pred_fallthru
    _
  // Predicated region
  $region26: #{a_call__.1} parent=0 // pred_check
    _
  $region27: #{a_call__.1} parent=0 // pred_check_branch
    %59 = sbr.rel (0) target = $region29
  $region28: #{a_call__.1} parent=0 // pred_region
    _
  $region29: #{a_call__.1} parent=0 // pred_fallthru
    _

</llo_original>
